<compile_context>
chip_gen: v6e
topology: v6e:2x2x1
jax: 0.10.0
libtpu: 0.0.40
codegen_flags: <defaults>
</compile_context>

<pallas_src>
import jax
import jax.numpy as jnp
from jax.experimental import pallas as pl
from jax.experimental.pallas import tpu as pltpu


# ---------------------------------------------------------------------------
# Kernels
# ---------------------------------------------------------------------------
def _gcn_layer_kernel(a_ref, h_ref, w_ref, b_ref, out_ref):
    """out_tile = relu(A_tile @ (H @ W) + b).

    a_ref: (TM, N) bf16 row tile of A_hat (streamed, double-buffered)
    h_ref: (N, F_in) bf16 node features (resident)
    w_ref: (F_in, F_out) bf16 weight (resident)
    b_ref: (1, F_out) f32 bias (resident)
    """
    # H @ W is recomputed per row tile; the extra MXU work is ~F_in/TM of the dominant
    # A_tile @ (HW) contraction (small), and it avoids an extra HBM round-trip for the
    # transformed features while staying safe under "parallel" grid semantics.
    hw = jnp.dot(h_ref[...], w_ref[...], preferred_element_type=jnp.float32)
    acc = jnp.dot(a_ref[...], hw.astype(jnp.bfloat16),
                  preferred_element_type=jnp.float32)
    out_ref[...] = jnp.maximum(acc + b_ref[...], 0.0).astype(out_ref.dtype)


def _gcn_layer_with_head_kernel(a_ref, h_ref, w2_ref, b2_ref, w3_ref, b3_ref, out_ref):
    """out_tile = relu(A_tile @ (H @ W2) + b2) @ w3 + b3, with the 1-wide Linear done
    as a lane reduction on the VPU/XLU instead of a lane-sparse MXU matmul."""
    hw = jnp.dot(h_ref[...], w2_ref[...], preferred_element_type=jnp.float32)
    acc = jnp.dot(a_ref[...], hw.astype(jnp.bfloat16),
                  preferred_element_type=jnp.float32)
    h2 = jnp.maximum(acc + b2_ref[...], 0.0)
    out = jnp.sum(h2 * w3_ref[...], axis=-1, keepdims=True) + b3_ref[...]
    out_ref[...] = out.astype(out_ref.dtype)


# ---------------------------------------------------------------------------
# Wrapper
# ---------------------------------------------------------------------------
def _pick_row_tile(n):
    # Small graphs: one full tile. Larger graphs: 256-row tiles (256-aligned for the
    # v6e/v7x MXU, 128-multiple for v5e, and double-buffered bf16 (256, N) A-tiles stay
    # far below the v7x 64 MiB VMEM ceiling). Ragged last tiles are masked by Pallas.
    return n if n <= 256 else 256


def just_graph_structure_forward(a_hat, x, w1, b1, w2, b2, w3, b3):
    """h1 = relu(A (X W1) + b1); h2 = relu(A (h1 W2) + b2); out = h2 W3 + b3."""
    n, f_in = x.shape
    f1 = w1.shape[1]
    f2 = w2.shape[1]
    tm = _pick_row_tile(n)
    grid = (pl.cdiv(n, tm),)

    bf = jnp.bfloat16
    a_bf = a_hat.astype(bf)                      # dominant O(N^2) byte stream -> bf16
    x_bf = x.astype(bf)
    w1_bf = w1.astype(bf)
    w2_bf = w2.astype(bf)
    b1_f = b1.astype(jnp.float32).reshape(1, f1)
    b2_f = b2.astype(jnp.float32).reshape(1, f2)
    w3_row = w3.astype(jnp.float32).reshape(1, f2)   # (layer2, 1) -> (1, layer2) row
    b3_f = b3.astype(jnp.float32).reshape(1, 1)

    params = pltpu.CompilerParams(
        dimension_semantics=("parallel",),           # shard row tiles across TCs (v7x)
        vmem_limit_bytes=48 * 1024 * 1024,           # > v5e 16 MiB default, < v7x 64 MiB ceiling
    )

    def resident(shape):
        return pl.BlockSpec(tuple(shape), lambda i: (0, 0))

    def row_tile(cols):
        return pl.BlockSpec((tm, cols), lambda i: (i, 0))

    # ---- GCNConv 1 (+ ReLU). dropout is identity in eval mode. ----
    # TODO(synk): training-mode dropout (stateful PRNG mask via pltpu.prng_*) omitted.
    h1 = pl.pallas_call(
        _gcn_layer_kernel,
        out_shape=jax.ShapeDtypeStruct((n, f1), bf),
        grid=grid,
        in_specs=[
            row_tile(n),                 # A_hat row tile, streamed
            resident((n, f_in)),         # X, resident
            resident((f_in, f1)),        # W1, resident
            resident((1, f1)),           # b1, resident
        ],
        out_specs=row_tile(f1),
        compiler_params=params,
    )(a_bf, x_bf, w1_bf, b1_f)

    # ---- GCNConv 2 (+ ReLU) with the Linear(layer2 -> 1) head fused into the epilogue. ----
    out = pl.pallas_call(
        _gcn_layer_with_head_kernel,
        out_shape=jax.ShapeDtypeStruct((n, 1), jnp.float32),
        grid=grid,
        in_specs=[
            row_tile(n),                 # A_hat row tile, streamed again
            resident((n, f1)),           # h1 (bf16), resident
            resident((f1, f2)),          # W2
            resident((1, f2)),           # b2
            resident((1, f2)),           # w3 as a row (VPU reduction)
            resident((1, 1)),            # b3
        ],
        out_specs=row_tile(1),
        compiler_params=params,
    )(a_bf, h1, w2_bf, b2_f, w3_row, b3_f)

    return out


# ---------------------------------------------------------------------------
# Graph glue (plain JAX): dense normalized adjacency from edge_index
# ---------------------------------------------------------------------------
def build_normalized_adjacency(edge_index, num_nodes):
    """Dense A_hat approximating torch_geometric GCNConv's gcn_norm:
    directed message passing src -> dst, duplicate edges accumulated, self-loops (weight 1),
    A_hat = D^{-1/2} (A + I) D^{-1/2} with D from the row sums."""
    # TODO(synk): exact add_remaining_self_loops semantics when edge_index already
    # contains self-loops; also, a block-sparse / CSR path (PrefetchScalarGridSpec) would
    # avoid materializing dense A_hat for large sparse graphs.
    src, dst = edge_index[0], edge_index[1]
    adj = jnp.zeros((num_nodes, num_nodes), jnp.float32)
    adj = adj.at[dst, src].add(1.0)                        # scatter-add duplicate edges
    adj = adj + jnp.eye(num_nodes, dtype=jnp.float32)      # self-loops
    deg = adj.sum(axis=1)
    d_inv_sqrt = jnp.where(deg > 0, jax.lax.rsqrt(deg), 0.0)
    return d_inv_sqrt[:, None] * adj * d_inv_sqrt[None, :]


# ---------------------------------------------------------------------------
# References
# ---------------------------------------------------------------------------
def bf16_matched_reference(a_hat, x, w1, b1, w2, b2, w3, b3):
    """Pure-JAX reference mirroring the kernel's bf16-in / f32-accumulate numerics."""
    bf = jnp.bfloat16
    a = a_hat.astype(bf)
    hw = jnp.dot(x.astype(bf), w1.astype(bf), preferred_element_type=jnp.float32)
    h1 = jnp.maximum(jnp.dot(a, hw.astype(bf), preferred_element_type=jnp.float32)
                     + b1.reshape(1, -1), 0.0).astype(bf)
    hw2 = jnp.dot(h1, w2.astype(bf), preferred_element_type=jnp.float32)
    h2 = jnp.maximum(jnp.dot(a, hw2.astype(bf), preferred_element_type=jnp.float32)
                     + b2.reshape(1, -1), 0.0)
    return jnp.sum(h2 * w3.reshape(1, -1), axis=-1, keepdims=True) + b3.reshape(1, 1)


def f32_reference(a_hat, x, w1, b1, w2, b2, w3, b3):
    h = jnp.maximum(a_hat @ (x @ w1) + b1, 0.0)
    h = jnp.maximum(a_hat @ (h @ w2) + b2, 0.0)
    return h @ w3 + b3


# ---------------------------------------------------------------------------
# Demo / self-check
# ---------------------------------------------------------------------------
if __name__ == "__main__":
    def run_case(num_nodes, num_features, layer1, layer2, num_edges, key):
        ks = jax.random.split(key, 8)
        x = jax.random.normal(ks[0], (num_nodes, num_features), jnp.float32)
        edge_index = jax.random.randint(ks[1], (2, num_edges), 0, num_nodes, jnp.int32)
        a_hat = build_normalized_adjacency(edge_index, num_nodes)

        w1 = jax.random.normal(ks[2], (num_features, layer1), jnp.float32) * 0.1
        b1 = jax.random.normal(ks[3], (1, layer1), jnp.float32) * 0.1
        w2 = jax.random.normal(ks[4], (layer1, layer2), jnp.float32) * 0.1
        b2 = jax.random.normal(ks[5], (1, layer2), jnp.float32) * 0.1
        w3 = jax.random.normal(ks[6], (layer2, 1), jnp.float32) * 0.1
        b3 = jax.random.normal(ks[7], (1, 1), jnp.float32) * 0.1

        out = just_graph_structure_forward(a_hat, x, w1, b1, w2, b2, w3, b3)
        out = jax.block_until_ready(out)
        assert out.shape == (num_nodes, 1), out.shape

        ref_matched = bf16_matched_reference(a_hat, x, w1, b1, w2, b2, w3, b3)
        ref_f32 = f32_reference(a_hat, x, w1, b1, w2, b2, w3, b3)
        assert jnp.allclose(out, ref_matched, atol=1e-4, rtol=1e-3), \
            "mismatch vs dtype-matched reference"
        assert jnp.allclose(out, ref_f32, atol=5e-2, rtol=5e-2), \
            "mismatch vs f32 reference"

    key = jax.random.PRNGKey(0)
    k_small, k_big = jax.random.split(key)

    # Small shapes consistent with the module (single-tile path, N == TM).
    run_case(num_nodes=16, num_features=32, layer1=32, layer2=16, num_edges=40, key=k_small)
    # Larger graph exercising the multi-tile "parallel" grid (two 256-row A_hat tiles).
    run_case(num_nodes=512, num_features=32, layer1=64, layer2=32, num_edges=2048, key=k_big)

    print("KERNEL_OK")
</pallas_src>

<mosaic_0001>
module attributes {stable_mosaic.version = 11 : i64} {
  func.func @_gcn_layer_kernel(%arg0: i32, %arg1: memref<16x16xbf16, #tpu.memory_space<vmem>>, %arg2: memref<16x32xbf16, #tpu.memory_space<vmem>>, %arg3: memref<32x32xbf16, #tpu.memory_space<vmem>>, %arg4: memref<1x32xf32, #tpu.memory_space<vmem>>, %arg5: memref<16x32xbf16, #tpu.memory_space<vmem>>) attributes {dimension_semantics = [#tpu.dimension_semantics<parallel>], iteration_bounds = array<i64: 1>, scalar_prefetch = 0 : i64, scratch_operands = 0 : i64, tpu.core_type = #tpu.core_type<tc>, window_params = [{transform_indices = @transform_0, window_bounds = array<i64: 16, 16>}, {pipeline_mode = #tpu.pipeline_mode<synchronous>, transform_indices = @transform_1, window_bounds = array<i64: 16, 32>}, {pipeline_mode = #tpu.pipeline_mode<synchronous>, transform_indices = @transform_2, window_bounds = array<i64: 32, 32>}, {pipeline_mode = #tpu.pipeline_mode<synchronous>, transform_indices = @transform_3, window_bounds = array<i64: 1, 32>}, {transform_indices = @transform_4, window_bounds = array<i64: 16, 32>}]} {
    %c0 = arith.constant 0 : index
    %c0_0 = arith.constant 0 : index
    %0 = vector.load %arg2[%c0, %c0_0] : memref<16x32xbf16, #tpu.memory_space<vmem>>, vector<16x32xbf16>
    %c0_1 = arith.constant 0 : index
    %c0_2 = arith.constant 0 : index
    %1 = vector.load %arg3[%c0_1, %c0_2] : memref<32x32xbf16, #tpu.memory_space<vmem>>, vector<32x32xbf16>
    %cst = arith.constant dense<0.000000e+00> : vector<16x32xf32>
    %2 = tpu.matmul %0, %1, %cst {dimension_numbers = #tpu.dot_dimension_numbers<[1], [0], [0], [1], [0, 0, 1, 1], [], []>} : vector<16x32xbf16>, vector<32x32xbf16>, vector<16x32xf32> -> vector<16x32xf32>
    %c0_3 = arith.constant 0 : index
    %c0_4 = arith.constant 0 : index
    %3 = vector.load %arg1[%c0_3, %c0_4] : memref<16x16xbf16, #tpu.memory_space<vmem>>, vector<16x16xbf16>
    %4 = arith.truncf %2 : vector<16x32xf32> to vector<16x32xbf16>
    %cst_5 = arith.constant dense<0.000000e+00> : vector<16x32xf32>
    %5 = tpu.matmul %3, %4, %cst_5 {dimension_numbers = #tpu.dot_dimension_numbers<[1], [0], [0], [1], [0, 0, 1, 1], [], []>} : vector<16x16xbf16>, vector<16x32xbf16>, vector<16x32xf32> -> vector<16x32xf32>
    %c0_6 = arith.constant 0 : index
    %c0_7 = arith.constant 0 : index
    %6 = vector.load %arg4[%c0_6, %c0_7] : memref<1x32xf32, #tpu.memory_space<vmem>>, vector<1x32xf32>
    %7 = vector.broadcast %6 : vector<1x32xf32> to vector<16x32xf32>
    %8 = arith.addf %5, %7 : vector<16x32xf32>
    %cst_8 = arith.constant 0.000000e+00 : f32
    %9 = vector.broadcast %cst_8 : f32 to vector<16x32xf32>
    %10 = arith.maximumf %8, %9 : vector<16x32xf32>
    %11 = arith.truncf %10 : vector<16x32xf32> to vector<16x32xbf16>
    %c0_9 = arith.constant 0 : index
    %c0_10 = arith.constant 0 : index
    %12 = vector.load %arg5[%c0_9, %c0_10] : memref<16x32xbf16, #tpu.memory_space<vmem>>, vector<16x32xbf16>
    tpu.vector_store %arg5[%c0_9, %c0_10], %11 {strides = array<i32>} : memref<16x32xbf16, #tpu.memory_space<vmem>>, vector<16x32xbf16>,
    return
  }
  func.func @transform_0(%arg0: i32) -> (i32, i32) {
    %c0_i32 = arith.constant 0 : i32
    %c0_i32_0 = arith.constant 0 : i32
    return %arg0, %c0_i32 : i32, i32
  }
  func.func @transform_1(%arg0: i32) -> (i32, i32) {
    %c0_i32 = arith.constant 0 : i32
    %c0_i32_0 = arith.constant 0 : i32
    %c0_i32_1 = arith.constant 0 : i32
    return %c0_i32, %c0_i32_0 : i32, i32
  }
  func.func @transform_2(%arg0: i32) -> (i32, i32) {
    %c0_i32 = arith.constant 0 : i32
    %c0_i32_0 = arith.constant 0 : i32
    %c0_i32_1 = arith.constant 0 : i32
    return %c0_i32, %c0_i32_0 : i32, i32
  }
  func.func @transform_3(%arg0: i32) -> (i32, i32) {
    %c0_i32 = arith.constant 0 : i32
    %c0_i32_0 = arith.constant 0 : i32
    %c0_i32_1 = arith.constant 0 : i32
    return %c0_i32, %c0_i32_0 : i32, i32
  }
  func.func @transform_4(%arg0: i32) -> (i32, i32) {
    %c0_i32 = arith.constant 0 : i32
    %c0_i32_0 = arith.constant 0 : i32
    return %arg0, %c0_i32 : i32, i32
  }
}

</mosaic_0001>

<llo_original>
// kernel: tpu_custom_call.1
$region0: #{tpu_custom_call.1}
  #allocation0 [shape = 'u32[]', space=smem, size = 0x4, offset = 0x4, fixed_abs, tag = 'smem constant byte address 0x4 - core index']
  #allocation1 [shape = 'u32[144,128]{1,0:T(1,128)}', space=vmem, size = 0x12000, scoped, tag = 'internal scratch']
  %s0 = inlined_call_operand.hbm [shape: bf16[16,16], index: 0, kind: input, shape index: {}]
  %s1 = inlined_call_operand.hbm [shape: bf16[16,32], index: 1, kind: input, shape index: {}]
  %s2 = inlined_call_operand.hbm [shape: bf16[32,32], index: 2, kind: input, shape index: {}]
  %s3 = inlined_call_operand.vmem [shape: f32[1,32], index: 3, kind: input, shape index: {}]
  %s4 = inlined_call_operand.hbm [shape: bf16[16,32], index: 4, kind: output, shape index: {}]
  %s5 = sld [smem:[#allocation0]]
  $region38: #{tpu_custom_call.1} parent=0
    _
  %s7 = ssub.s32 1, %s5
  %s8 = scalar_select 0, %s7, %s5
  $region1: #{tpu_custom_call.1} parent=0
    #allocation2 [shape = 'u8[4096]{0}', space=vmem, size = 0x1000, scoped, tag = 'input window, operand 0, single buffered']
    #allocation3 [shape = 's32[1]{0}', space=sflag, size = 0x4, scoped, tag = 'scoped memory for tpu_custom_call.1']
    #allocation4 [shape = 's32[1]{0}', space=sflag, size = 0x4, scoped, tag = 'scoped memory for tpu_custom_call.1']
    #allocation5 [shape = 'u8[4096]{0}', space=vmem, size = 0x1000, scoped, tag = 'input window, operand 1, single buffered']
    #allocation6 [shape = 's32[1]{0}', space=sflag, size = 0x4, scoped, tag = 'scoped memory for tpu_custom_call.1']
    #allocation7 [shape = 'u8[8192]{0}', space=vmem, size = 0x2000, scoped, tag = 'input window, operand 2, single buffered']
    #allocation8 [shape = 'u8[4096]{0}', space=vmem, size = 0x1000, scoped, tag = 'output window, operand 0, single buffered']
    %9 = vsyncpa [#allocation3], 0
    %10 = vsyncpa [#allocation6], 0
    %11 = vsyncpa [#allocation4], 0
    // Predicated region
    $region2: #{tpu_custom_call.1} parent=1 // pred_check
      _
    $region3: #{tpu_custom_call.1} parent=1 // pred_check_branch
      %13 = sbr.rel (0) target = $region5
    $region4: #{tpu_custom_call.1} parent=1 // pred_region
      %s15 = ssub.s32 128, 128
      %16 = vsyncadd [#allocation3], %s15
      %s17 = sshll.u32 [#allocation2], 4
      %s18 = int_to_ptr.vmem [resolvable:$true] %s17
      %23 = dma.hbm_to_vmem [thread:$0]  %s0, 128, %s18, [#allocation3], 64, 64, 4
    $region5: #{tpu_custom_call.1} parent=1 // pred_fallthru
      _
    // Predicated region
    $region6: #{tpu_custom_call.1} parent=1 // pred_check
      _
    $region7: #{tpu_custom_call.1} parent=1 // pred_check_branch
      %25 = sbr.rel (0) target = $region9
    $region8: #{tpu_custom_call.1} parent=1 // pred_region
      %s27 = ssub.s32 128, 128
      %28 = vsyncadd [#allocation6], %s27
      %s29 = sshll.u32 [#allocation5], 4
      %s30 = int_to_ptr.vmem [resolvable:$true] %s29
      %35 = dma.hbm_to_vmem [thread:$0]  %s1, 128, %s30, [#allocation6], 64, 64, 4
    $region9: #{tpu_custom_call.1} parent=1 // pred_fallthru
      _
    // Predicated region
    $region10: #{tpu_custom_call.1} parent=1 // pred_check
      _
    $region11: #{tpu_custom_call.1} parent=1 // pred_check_branch
      %37 = sbr.rel (0) target = $region13
    $region12: #{tpu_custom_call.1} parent=1 // pred_region
      %s39 = ssub.s32 256, 256
      %40 = vsyncadd [#allocation6], %s39
      %s41 = sshll.u32 [#allocation7], 4
      %s42 = int_to_ptr.vmem [resolvable:$true] %s41
      %47 = dma.hbm_to_vmem [thread:$0]  %s2, 256, %s42, [#allocation6], 64, 64, 4
    $region13: #{tpu_custom_call.1} parent=1 // pred_fallthru
      _
    // Predicated region
    $region14: #{tpu_custom_call.1} parent=1 // pred_check
      _
    $region15: #{tpu_custom_call.1} parent=1 // pred_check_branch
      %49 = sbr.rel (0) target = $region17
    $region16: #{tpu_custom_call.1} parent=1 // pred_region
      _
    $region17: #{tpu_custom_call.1} parent=1 // pred_fallthru
      _
    // Predicated region
    $region18: #{tpu_custom_call.1} parent=1 // pred_check
      _
    $region19: #{tpu_custom_call.1} parent=1 // pred_check_branch
      %51 = sbr.rel (0) target = $region21
    $region20: #{tpu_custom_call.1} parent=1 // pred_region
      %52 = dma.done [#allocation3], 128
    $region21: #{tpu_custom_call.1} parent=1 // pred_fallthru
      _
    // Predicated region
    $region22: #{tpu_custom_call.1} parent=1 // pred_check
      _
    $region23: #{tpu_custom_call.1} parent=1 // pred_check_branch
      %54 = sbr.rel (0) target = $region25
    $region24: #{tpu_custom_call.1} parent=1 // pred_region
      %55 = dma.done [#allocation6], 128
    $region25: #{tpu_custom_call.1} parent=1 // pred_fallthru
      _
    // Predicated region
    $region26: #{tpu_custom_call.1} parent=1 // pred_check
      _
    $region27: #{tpu_custom_call.1} parent=1 // pred_check_branch
      %57 = sbr.rel (0) target = $region29
    $region28: #{tpu_custom_call.1} parent=1 // pred_region
      %58 = dma.done [#allocation6], 256
    $region29: #{tpu_custom_call.1} parent=1 // pred_fallthru
      _
    %v60 = vld [vmem:[#allocation5] sm:$0xf]
    %v61 = vld [vmem:[#allocation5 + $0x4] sm:$0xf]
    %v62 = vld [vmem:[#allocation7] sm:$0xf]
    %v63 = vld [vmem:[#allocation7 + $0x4] sm:$0xf]
    %v64 = vld [vmem:[#allocation7 + $0x8] sm:$0xf]
    %v65 = vld [vmem:[#allocation7 + $0xc] sm:$0xf]
    %v68 = vunpack.c.l.b16 %v60
    %v69 = vunpack.c.l.b16 %v61
    %v70 = vpack.c.b16 %v69, %v68
    %v75 = vunpack.c.l.b16 %v62
    %v76 = vunpack.c.l.b16 %v63
    %v77 = vunpack.c.l.b16 %v64
    %v78 = vunpack.c.l.b16 %v65
    %v79 = vpack.c.b16 %v76, %v75
    %v80 = vpack.c.b16 %v78, %v77
    %vm83 = vcmask 261120
    %v85 = vsel %vm83, %v70, 0
    %87 = vmatprep.subr.bf16.mxu0 0
    %88 = vmatpush1.bf16.msra.mxu0 0
    %89 = vmatprep.subr.bf16.mxu0 0
    %90 = vmatpush1.bf16.msra.mxu0 0
    %91 = vmatprep.subr.bf16.mxu0 0
    %92 = vmatpush1.bf16.msra.mxu0 0
    %93 = vmatprep.subr.bf16.mxu0 0
    %94 = vmatpush1.bf16.msra.mxu0 0
    %95 = vmatprep.subr.bf16.mxu0 0
    %96 = vmatpush1.bf16.msra.mxu0 0
    %97 = vmatprep.subr.bf16.mxu0 0
    %98 = vmatpush1.bf16.msra.mxu0 0
    %99 = vmatprep.subr.bf16.mxu0 0
    %100 = vmatpush1.bf16.msra.mxu0 %v80
    %101 = vmatprep.subr.bf16.mxu0 0
    %102 = vmatpush1.bf16.msra.mxu0 %v79
    %103 = vmatprep.subr.bf16.mxu0 0
    %104 = vmatpush2.bf16.msra.mxu0 0
    %105 = vmatprep.subr.bf16.mxu0 0
    %106 = vmatpush2.bf16.msra.mxu0 0
    %107 = vmatprep.subr.bf16.mxu0 0
    %108 = vmatpush2.bf16.msra.mxu0 0
    %109 = vmatprep.subr.bf16.mxu0 0
    %110 = vmatpush2.bf16.msra.mxu0 0
    %111 = vmatprep.subr.bf16.mxu0 0
    %112 = vmatpush2.bf16.msra.mxu0 0
    %113 = vmatprep.subr.bf16.mxu0 0
    %114 = vmatpush2.bf16.msra.mxu0 0
    %115 = vmatprep.subr.bf16.mxu0 0
    %116 = vmatpush2.bf16.msra.mxu0 0
    %117 = vmatprep.subr.bf16.mxu0 0
    %118 = vmatpush2.bf16.msra.mxu0 0
    %119 = vmatprep.mubr.bf16.mxu0 0
    %120 = vmatmul.mubr.bf16.gmra.mxu0 %v85
    %v121 = vpop.f32.mrf.mxu0
    %v122 = vadd.f32 0.0, %v121
    %v123 = vpop.f32.mrf.mxu0
    %v124 = vpop.f32.mrf.mxu0
    %v125 = vadd.f32 0.0, %v124
    %v126 = vpop.f32.mrf.mxu0
    %127 = vdwg.mxu0
    %v128 = vld [vmem:[#allocation2] sm:$0xf]
    %v129 = vld [vmem:[#allocation2 + $0x4] sm:$0xf]
    %v130 = vpack.c.bf16 %v125, %v122
    %v131 = vld [vmem:[%s3] sm:$0x1]
    %v133 = vlaneseq
    %v134 = vshrl.u32 %v133, 7
    %v135 = vsub.s32 0, %v134
    %v136 = vrot.slane %v131, %v135
    %v140 = vunpack.c.l.b16 %v128
    %v141 = vunpack.c.l.b16 %v129
    %v142 = vpack.c.b16 %v141, %v140
    %vm143 = vcmask 130048
    %v145 = vsel %vm143, %v142, 0
    %147 = vmatprep.subr.bf16.mxu0 0
    %148 = vmatpush1.bf16.msra.mxu0 0
    %149 = vmatprep.subr.bf16.mxu0 0
    %150 = vmatpush1.bf16.msra.mxu0 0
    %151 = vmatprep.subr.bf16.mxu0 0
    %152 = vmatpush1.bf16.msra.mxu0 0
    %153 = vmatprep.subr.bf16.mxu0 0
    %154 = vmatpush1.bf16.msra.mxu0 0
    %155 = vmatprep.subr.bf16.mxu0 0
    %156 = vmatpush1.bf16.msra.mxu0 0
    %157 = vmatprep.subr.bf16.mxu0 0
    %158 = vmatpush1.bf16.msra.mxu0 0
    %159 = vmatprep.subr.bf16.mxu0 0
    %160 = vmatpush1.bf16.msra.mxu0 0
    %161 = vmatprep.subr.bf16.mxu0 0
    %162 = vmatpush1.bf16.msra.mxu0 %v130
    %163 = vmatprep.subr.bf16.mxu0 0
    %164 = vmatpush2.bf16.msra.mxu0 0
    %165 = vmatprep.subr.bf16.mxu0 0
    %166 = vmatpush2.bf16.msra.mxu0 0
    %167 = vmatprep.subr.bf16.mxu0 0
    %168 = vmatpush2.bf16.msra.mxu0 0
    %169 = vmatprep.subr.bf16.mxu0 0
    %170 = vmatpush2.bf16.msra.mxu0 0
    %171 = vmatprep.subr.bf16.mxu0 0
    %172 = vmatpush2.bf16.msra.mxu0 0
    %173 = vmatprep.subr.bf16.mxu0 0
    %174 = vmatpush2.bf16.msra.mxu0 0
    %175 = vmatprep.subr.bf16.mxu0 0
    %176 = vmatpush2.bf16.msra.mxu0 0
    %177 = vmatprep.subr.bf16.mxu0 0
    %178 = vmatpush2.bf16.msra.mxu0 0
    %179 = vmatprep.mubr.bf16.mxu0 0
    %180 = vmatmul.mubr.bf16.gmra.mxu0 %v145
    %v181 = vpop.f32.mrf.mxu0
    %v182 = vadd.f32 %v136, %v181
    %v183 = vpop.f32.mrf.mxu0
    %v184 = vpop.f32.mrf.mxu0
    %v185 = vadd.f32 %v136, %v184
    %v186 = vpop.f32.mrf.mxu0
    %187 = vdwg.mxu0
    %v188 = vmax.f32 %v182, 0.0
    %v189 = vmax.f32 %v185, 0.0
    %v190 = vpack.c.bf16 %v189, %v188
    %v192 = vunpack.c.l.b16 %v190
    %v193 = vunpack.c.h.b16 %v190
    %v194 = vpack.c.b16 %v192, %v192
    %v195 = vpack.c.b16 %v193, %v193
    %vm198 = vcmask 257024
    %199 = vst.msk [vmem:[#allocation8] sm:$0xf] %vm198, %v194
    %200 = vst.msk [vmem:[#allocation8 + $0x4] sm:$0xf] %vm198, %v195
    // Predicated region
    $region30: #{tpu_custom_call.1} parent=1 // pred_check
      _
    $region31: #{tpu_custom_call.1} parent=1 // pred_check_branch
      %202 = sbr.rel (0) target = $region33
    $region32: #{tpu_custom_call.1} parent=1 // pred_region
      %s204 = ssub.s32 128, 128
      %205 = vsyncadd [#allocation4], %s204
      %s206 = sshll.u32 [#allocation8], 4
      %s207 = int_to_ptr.vmem [resolvable:$true] %s206
      %212 = dma.vmem_to_hbm [thread:$0]  %s207, 128, %s4, [#allocation4], 64, 64, 4
    $region33: #{tpu_custom_call.1} parent=1 // pred_fallthru
      _
    // Predicated region
    $region34: #{tpu_custom_call.1} parent=1 // pred_check
      _
    $region35: #{tpu_custom_call.1} parent=1 // pred_check_branch
      %214 = sbr.rel (0) target = $region37
    $region36: #{tpu_custom_call.1} parent=1 // pred_region
      %215 = dma.done [#allocation4], 128
    $region37: #{tpu_custom_call.1} parent=1 // pred_fallthru
      _
    %216 = vsyncpa [#allocation3], 1
    %217 = vsyncpa [#allocation6], 1
    %218 = vsyncpa [#allocation4], 1

</llo_original>
